<compile_context>
chip_gen: v6e
topology: v6e:2x2x1
jax: 0.10.0
libtpu: 0.0.40
codegen_flags: <defaults>
</compile_context>

<pallas_src>
import functools

import jax
import jax.numpy as jnp
from jax import lax
from jax.experimental import pallas as pl
from jax.experimental.pallas import tpu as pltpu

# dot_general dimension numbers for "contract the last dim of both operands",
# i.e. a @ b.T without materializing any transpose.
_CONTRACT_LAST = (((1,), (1,)), ((), ()))


def _mha_kernel(xq_ref, xk_ref, xv_ref, wq_ref, wk_ref, wv_ref, wz_ref,
                out_ref, q_scr, ctx_scr, *, n_heads: int, d_heads: int):
    kb = pl.program_id(1)
    last_kb = pl.num_programs(1) - 1
    inv_scale = 1.0 / (float(d_heads) ** 0.5)

    # ---- once per batch element (kb == 0): project + pre-scale q, zero ctx --
    @pl.when(kb == 0)
    def _():
        xq = xq_ref[...]                                          # (L, E) bf16

        def q_body(h, carry):
            qh = lax.dot_general(xq, wq_ref[h], _CONTRACT_LAST,   # (L, Dh) f32
                                 preferred_element_type=jnp.float32)
            # Fold 1/sqrt(Dh) into q once (review item).
            q_scr[h] = (qh * inv_scale).astype(jnp.bfloat16)
            return carry

        lax.fori_loop(0, n_heads, q_body, 0)
        ctx_scr[...] = jnp.zeros_like(ctx_scr)

    # ---- per key block, per head: project k/v, scores, softmax, context -----
    xk = xk_ref[...]                                              # (TK, E) bf16
    xv = xv_ref[...]                                              # (TK, E) bf16

    def head_body(h, carry):
        k_h = lax.dot_general(xk, wk_ref[h], _CONTRACT_LAST,      # (TK, Dh)
                              preferred_element_type=jnp.float32
                              ).astype(jnp.bfloat16)
        v_h = lax.dot_general(xv, wv_ref[h], _CONTRACT_LAST,      # (TK, Dh)
                              preferred_element_type=jnp.float32
                              ).astype(jnp.bfloat16)

        # sims = (q/sqrt(Dh)) @ k^T  -> (L, TK), f32, no explicit transpose.
        sims = lax.dot_general(q_scr[h], k_h, _CONTRACT_LAST,
                               preferred_element_type=jnp.float32)

        # TODO(synk): optional boolean `mask` (masked_fill with -1e9) from the
        # PyTorch module is not wired in; this forward assumes mask=None.

        # softmax over dim=-2 (the QUERY axis), exactly as in the PyTorch code.
        # All L queries are present in this tile, so every key column of this
        # key block is normalized exactly (no online-softmax machinery needed).
        m = jnp.max(sims, axis=0, keepdims=True)                  # (1, TK)
        e = jnp.exp(sims - m)                                     # (L, TK) f32
        denom = jnp.sum(e, axis=0, keepdims=True)                 # (1, TK)
        attn = e * pl.reciprocal(denom)                           # exact recip

        # Partial head context for this key block, accumulated across kb.
        ctx_scr[h] += jnp.dot(attn.astype(jnp.bfloat16), v_h,
                              preferred_element_type=jnp.float32)
        return carry

    lax.fori_loop(0, n_heads, head_body, 0)

    # ---- after the last key block: output projection W_z, per head ----------
    @pl.when(kb == last_kb)
    def _():
        out_ref[...] = jnp.zeros_like(out_ref)

        def z_body(h, carry):
            # ctx[h] (L, Dh) contracted with Wz[:, h*Dh:(h+1)*Dh] (E, Dh).
            z_h = lax.dot_general(ctx_scr[h].astype(jnp.bfloat16), wz_ref[h],
                                  _CONTRACT_LAST,
                                  preferred_element_type=jnp.float32)  # (L, E)
            out_ref[...] += z_h.astype(out_ref.dtype)
            return carry

        lax.fori_loop(0, n_heads, z_body, 0)


def _pick_kv_block(L: int, target: int):
    """Returns (key_block, padded_key_len). key_block is either the whole
    (small) sequence or a 128-multiple `target`; keys are zero-padded up to a
    multiple of the block (exactly neutral under the dim=-2 softmax)."""
    if L <= target:
        return L, L
    tk = target
    lk_pad = ((L + tk - 1) // tk) * tk
    return tk, lk_pad


def multi_head_attention(xq, xk, xv, wq, wk, wv, wz, *, n_heads: int,
                         kv_block: int = 256):
    """xq/xk/xv: (B, L, E) float32; w*: (E, E) nn.Linear weight (out, in)."""
    B, L, E = xq.shape
    assert E % n_heads == 0
    assert kv_block % 128 == 0, "kv_block must be a multiple of 128"
    d_heads = E // n_heads

    tk, lk_pad = _pick_kv_block(L, kv_block)
    n_kb = lk_pad // tk

    # bf16 activations + weights for the MXU (kernel accumulates in f32).
    xq_b = xq.astype(jnp.bfloat16)
    xk_b = xk.astype(jnp.bfloat16)
    xv_b = xv.astype(jnp.bfloat16)
    if lk_pad != L:
        # Zero-padded keys are exactly neutral here: padded k rows give all-zero
        # score COLUMNS, the dim=-2 softmax normalizes every key column
        # independently, and the matching zero v rows contribute nothing.
        pad = ((0, 0), (0, lk_pad - L), (0, 0))
        xk_b = jnp.pad(xk_b, pad)
        xv_b = jnp.pad(xv_b, pad)

    # Heads-leading weight layout: (E_out, E_in) -> (H, Dh, E_in), so the kernel
    # projects per head via zero-cost leading-axis views (no lane slicing).
    wq_r = wq.astype(jnp.bfloat16).reshape(n_heads, d_heads, E)
    wk_r = wk.astype(jnp.bfloat16).reshape(n_heads, d_heads, E)
    wv_r = wv.astype(jnp.bfloat16).reshape(n_heads, d_heads, E)
    # W_z contracts the concat-of-heads axis: (E_out, H*Dh) -> (H, E_out, Dh).
    wz_r = wz.astype(jnp.bfloat16).reshape(E, n_heads, d_heads).transpose(1, 0, 2)

    kernel = functools.partial(_mha_kernel, n_heads=n_heads, d_heads=d_heads)

    # Squeezed leading batch dim: kernel sees (L, E) / (TK, E) refs directly.
    xq_spec = pl.BlockSpec((None, L, E), lambda b, kb: (b, 0, 0))
    xkv_spec = pl.BlockSpec((None, tk, E), lambda b, kb: (b, kb, 0))
    # Constant index maps: weight blocks are DMA'd into VMEM once.
    # TODO(synk): single-buffer them (pipeline_mode=pl.Buffered(1)) to halve
    # their VMEM footprint once that lowering path is universally available.
    w_spec = pl.BlockSpec((n_heads, d_heads, E), lambda b, kb: (0, 0, 0))
    wz_spec = pl.BlockSpec((n_heads, E, d_heads), lambda b, kb: (0, 0, 0))
    out_spec = pl.BlockSpec((None, L, E), lambda b, kb: (b, 0, 0))

    # VMEM budget derived from the actual tile sizes (review: don't hardcode
    # the physical limit; v7x only has 64 MiB/TC).
    bytes_in = 2 * (L * E * 2) + 2 * 2 * (tk * E * 2)    # double-buffered bf16
    bytes_out = 2 * (L * E * 4)                          # double-buffered f32
    bytes_w = 2 * 4 * (E * E * 2)                        # four bf16 weights
    bytes_scr = L * E * 2 + L * E * 4                    # q_scr + ctx_scr
    bytes_live = 3 * L * tk * 4                          # live (L,TK) f32 tiles
    footprint = bytes_in + bytes_out + bytes_w + bytes_scr + bytes_live
    vmem_limit = int(min(max(footprint * 3 // 2, 32 << 20), 96 << 20))
    # TODO(synk): very large L*E on v7x additionally needs a query-tile grid
    # axis with an online dim=-2 softmax; not wired in here.

    flops = 8 * B * L * E * E + 4 * B * L * lk_pad * E
    transcendentals = B * n_heads * L * lk_pad
    bytes_accessed = 3 * B * L * E * 2 + 4 * E * E * 2 + B * L * E * 4

    return pl.pallas_call(
        kernel,
        out_shape=jax.ShapeDtypeStruct((B, L, E), xq.dtype),
        grid_spec=pltpu.PrefetchScalarGridSpec(
            num_scalar_prefetch=0,
            grid=(B, n_kb),
            in_specs=[xq_spec, xkv_spec, xkv_spec,
                      w_spec, w_spec, w_spec, wz_spec],
            out_specs=out_spec,
            scratch_shapes=[
                pltpu.VMEM((n_heads, L, d_heads), jnp.bfloat16),  # scaled q
                pltpu.VMEM((n_heads, L, d_heads), jnp.float32),   # ctx accum
            ],
        ),
        compiler_params=pltpu.CompilerParams(
            dimension_semantics=("parallel", "arbitrary"),
            vmem_limit_bytes=vmem_limit,
        ),
        cost_estimate=pl.CostEstimate(
            flops=flops,
            transcendentals=transcendentals,
            bytes_accessed=bytes_accessed),
    )(xq_b, xk_b, xv_b, wq_r, wk_r, wv_r, wz_r)


def _reference(xq, xk, xv, wq, wk, wv, wz, *, n_heads: int):
    """Pure-JAX (f32) re-implementation of the PyTorch forward."""
    B, L, E = xq.shape
    dh = E // n_heads

    def split(x):  # (B, L, E) -> (B, H, L, Dh)
        return x.reshape(B, L, n_heads, dh).transpose(0, 2, 1, 3)

    q = split(xq @ wq.T)
    k = split(xk @ wk.T)
    v = split(xv @ wv.T)
    sims = jnp.einsum("bhqd,bhkd->bhqk", q, k) / (dh ** 0.5)
    attn = jax.nn.softmax(sims, axis=-2)                 # softmax over QUERY axis
    out = jnp.einsum("bhqk,bhkd->bhqd", attn, v)
    out = out.transpose(0, 2, 1, 3).reshape(B, L, E)
    return out @ wz.T


if __name__ == "__main__":
    def run_case(key, B, L, d_model, n_heads, kv_block):
        ks = jax.random.split(key, 7)
        xq = jax.random.normal(ks[0], (B, L, d_model), dtype=jnp.float32)
        xk = jax.random.normal(ks[1], (B, L, d_model), dtype=jnp.float32)
        xv = jax.random.normal(ks[2], (B, L, d_model), dtype=jnp.float32)
        bound = 1.0 / (d_model ** 0.5)
        wq, wk, wv, wz = (jax.random.uniform(k, (d_model, d_model), jnp.float32,
                                             -bound, bound) for k in ks[3:7])
        z = multi_head_attention(xq, xk, xv, wq, wk, wv, wz,
                                 n_heads=n_heads, kv_block=kv_block)
        z = jax.block_until_ready(z)
        z_ref = _reference(xq, xk, xv, wq, wk, wv, wz, n_heads=n_heads)
        assert z.shape == (B, L, d_model)
        # Tolerance accounts for bf16 MXU operands (f32 accumulation).
        assert jnp.allclose(z, z_ref, atol=3e-2, rtol=3e-2), "mismatch vs reference"

    root = jax.random.PRNGKey(0)
    k_small, k_big = jax.random.split(root)

    # Small canonical case (single key block, matches the module defaults).
    run_case(k_small, B=2, L=8, d_model=32, n_heads=2, kv_block=256)
    # Multi-key-block case exercising key padding + ctx accumulation
    # (L=320 -> three 128-wide key blocks, last one zero-padded).
    run_case(k_big, B=1, L=320, d_model=64, n_heads=4, kv_block=128)

    print("KERNEL_OK")
</pallas_src>

<mosaic_0001>
module attributes {stable_mosaic.version = 11 : i64} {
  func.func @_mha_kernel(%arg0: i32, %arg1: i32, %arg2: memref<1x8x32xbf16, #tpu.memory_space<vmem>>, %arg3: memref<1x8x32xbf16, #tpu.memory_space<vmem>>, %arg4: memref<1x8x32xbf16, #tpu.memory_space<vmem>>, %arg5: memref<2x16x32xbf16, #tpu.memory_space<vmem>>, %arg6: memref<2x16x32xbf16, #tpu.memory_space<vmem>>, %arg7: memref<2x16x32xbf16, #tpu.memory_space<vmem>>, %arg8: memref<2x32x16xbf16, #tpu.memory_space<vmem>>, %arg9: memref<1x8x32xf32, #tpu.memory_space<vmem>>, %arg10: memref<2x8x16xbf16, #tpu.memory_space<vmem>>, %arg11: memref<2x8x16xf32, #tpu.memory_space<vmem>>) attributes {dimension_semantics = [#tpu.dimension_semantics<parallel>, #tpu.dimension_semantics<arbitrary>], iteration_bounds = array<i64: 2, 1>, scalar_prefetch = 0 : i64, scratch_operands = 2 : i64, tpu.core_type = #tpu.core_type<tc>, window_params = [{transform_indices = @transform_0, window_bounds = array<i64: 1, 8, 32>}, {transform_indices = @transform_1, window_bounds = array<i64: 1, 8, 32>}, {transform_indices = @transform_2, window_bounds = array<i64: 1, 8, 32>}, {pipeline_mode = #tpu.pipeline_mode<synchronous>, transform_indices = @transform_3, window_bounds = array<i64: 2, 16, 32>}, {pipeline_mode = #tpu.pipeline_mode<synchronous>, transform_indices = @transform_4, window_bounds = array<i64: 2, 16, 32>}, {pipeline_mode = #tpu.pipeline_mode<synchronous>, transform_indices = @transform_5, window_bounds = array<i64: 2, 16, 32>}, {pipeline_mode = #tpu.pipeline_mode<synchronous>, transform_indices = @transform_6, window_bounds = array<i64: 2, 32, 16>}, {transform_indices = @transform_7, window_bounds = array<i64: 1, 8, 32>}]} {
    %c0_i32 = arith.constant 0 : i32
    %0 = arith.cmpi eq, %arg1, %c0_i32 : i32
    %1 = arith.extui %0 : i1 to i32
    %c0_i32_0 = arith.constant 0 : i32
    %2 = arith.cmpi ne, %1, %c0_i32_0 : i32
    scf.if %2 {
      %c0_10 = arith.constant 0 : index
      %c0_11 = arith.constant 0 : index
      %c0_12 = arith.constant 0 : index
      %11 = vector.load %arg2[%c0_10, %c0_11, %c0_12] : memref<1x8x32xbf16, #tpu.memory_space<vmem>>, vector<1x8x32xbf16>
      %12 = vector.shape_cast %11 : vector<1x8x32xbf16> to vector<8x32xbf16>
      %c0_i32_13 = arith.constant 0 : i32
      %c2_i32_14 = arith.constant 2 : i32
      %13 = arith.addi %c0_i32_13, %c2_i32_14 : i32
      %c1_i32_15 = arith.constant 1 : i32
      scf.for %arg12 = %c0_i32_13 to %13 step %c1_i32_15  : i32 {
        %16 = arith.index_cast %arg12 : i32 to index
        %c0_20 = arith.constant 0 : index
        %c0_21 = arith.constant 0 : index
        %17 = vector.load %arg5[%16, %c0_20, %c0_21] : memref<2x16x32xbf16, #tpu.memory_space<vmem>>, vector<1x16x32xbf16>
        %18 = vector.shape_cast %17 : vector<1x16x32xbf16> to vector<16x32xbf16>
        %cst_22 = arith.constant dense<0.000000e+00> : vector<8x16xf32>
        %19 = tpu.matmul %12, %18, %cst_22 {dimension_numbers = #tpu.dot_dimension_numbers<[1], [1], [0], [0], [0, 0, 1, 0], [], []>} : vector<8x32xbf16>, vector<16x32xbf16>, vector<8x16xf32> -> vector<8x16xf32>
        %cst_23 = arith.constant 2.500000e-01 : f32
        %20 = vector.broadcast %cst_23 : f32 to vector<8x16xf32>
        %21 = arith.mulf %19, %20 : vector<8x16xf32>
        %22 = arith.truncf %21 : vector<8x16xf32> to vector<8x16xbf16>
        %23 = arith.index_cast %arg12 : i32 to index
        %c0_24 = arith.constant 0 : index
        %c0_25 = arith.constant 0 : index
        %24 = vector.load %arg10[%23, %c0_24, %c0_25] : memref<2x8x16xbf16, #tpu.memory_space<vmem>>, vector<1x8x16xbf16>
        %25 = vector.shape_cast %24 : vector<1x8x16xbf16> to vector<8x16xbf16>
        %26 = vector.shape_cast %22 : vector<8x16xbf16> to vector<1x8x16xbf16>
        tpu.vector_store %arg10[%23, %c0_24, %c0_25], %26 {strides = array<i32>} : memref<2x8x16xbf16, #tpu.memory_space<vmem>>, vector<1x8x16xbf16>,
      }
      %c2_i32_16 = arith.constant 2 : i32
      %cst = arith.constant 0.000000e+00 : f32
      %14 = vector.broadcast %cst : f32 to vector<2x8x16xf32>
      %c0_17 = arith.constant 0 : index
      %c0_18 = arith.constant 0 : index
      %c0_19 = arith.constant 0 : index
      %15 = vector.load %arg11[%c0_17, %c0_18, %c0_19] : memref<2x8x16xf32, #tpu.memory_space<vmem>>, vector<2x8x16xf32>
      tpu.vector_store %arg11[%c0_17, %c0_18, %c0_19], %14 {strides = array<i32>} : memref<2x8x16xf32, #tpu.memory_space<vmem>>, vector<2x8x16xf32>,
    } else {
    }
    %c0 = arith.constant 0 : index
    %c0_1 = arith.constant 0 : index
    %c0_2 = arith.constant 0 : index
    %3 = vector.load %arg3[%c0, %c0_1, %c0_2] : memref<1x8x32xbf16, #tpu.memory_space<vmem>>, vector<1x8x32xbf16>
    %4 = vector.shape_cast %3 : vector<1x8x32xbf16> to vector<8x32xbf16>
    %c0_3 = arith.constant 0 : index
    %c0_4 = arith.constant 0 : index
    %c0_5 = arith.constant 0 : index
    %5 = vector.load %arg4[%c0_3, %c0_4, %c0_5] : memref<1x8x32xbf16, #tpu.memory_space<vmem>>, vector<1x8x32xbf16>
    %6 = vector.shape_cast %5 : vector<1x8x32xbf16> to vector<8x32xbf16>
    %c0_i32_6 = arith.constant 0 : i32
    %c2_i32 = arith.constant 2 : i32
    %7 = arith.addi %c0_i32_6, %c2_i32 : i32
    %c1_i32 = arith.constant 1 : i32
    scf.for %arg12 = %c0_i32_6 to %7 step %c1_i32  : i32 {
      %11 = arith.index_cast %arg12 : i32 to index
      %c0_10 = arith.constant 0 : index
      %c0_11 = arith.constant 0 : index
      %12 = vector.load %arg6[%11, %c0_10, %c0_11] : memref<2x16x32xbf16, #tpu.memory_space<vmem>>, vector<1x16x32xbf16>
      %13 = vector.shape_cast %12 : vector<1x16x32xbf16> to vector<16x32xbf16>
      %cst = arith.constant dense<0.000000e+00> : vector<8x16xf32>
      %14 = tpu.matmul %4, %13, %cst {dimension_numbers = #tpu.dot_dimension_numbers<[1], [1], [0], [0], [0, 0, 1, 0], [], []>} : vector<8x32xbf16>, vector<16x32xbf16>, vector<8x16xf32> -> vector<8x16xf32>
      %15 = arith.truncf %14 : vector<8x16xf32> to vector<8x16xbf16>
      %16 = arith.index_cast %arg12 : i32 to index
      %c0_12 = arith.constant 0 : index
      %c0_13 = arith.constant 0 : index
      %17 = vector.load %arg7[%16, %c0_12, %c0_13] : memref<2x16x32xbf16, #tpu.memory_space<vmem>>, vector<1x16x32xbf16>
      %18 = vector.shape_cast %17 : vector<1x16x32xbf16> to vector<16x32xbf16>
      %cst_14 = arith.constant dense<0.000000e+00> : vector<8x16xf32>
      %19 = tpu.matmul %6, %18, %cst_14 {dimension_numbers = #tpu.dot_dimension_numbers<[1], [1], [0], [0], [0, 0, 1, 0], [], []>} : vector<8x32xbf16>, vector<16x32xbf16>, vector<8x16xf32> -> vector<8x16xf32>
      %20 = arith.truncf %19 : vector<8x16xf32> to vector<8x16xbf16>
      %21 = arith.index_cast %arg12 : i32 to index
      %c0_15 = arith.constant 0 : index
      %c0_16 = arith.constant 0 : index
      %22 = vector.load %arg10[%21, %c0_15, %c0_16] : memref<2x8x16xbf16, #tpu.memory_space<vmem>>, vector<1x8x16xbf16>
      %23 = vector.shape_cast %22 : vector<1x8x16xbf16> to vector<8x16xbf16>
      %cst_17 = arith.constant dense<0.000000e+00> : vector<8x8xf32>
      %24 = tpu.matmul %23, %15, %cst_17 {dimension_numbers = #tpu.dot_dimension_numbers<[1], [1], [0], [0], [0, 0, 1, 0], [], []>} : vector<8x16xbf16>, vector<8x16xbf16>, vector<8x8xf32> -> vector<8x8xf32>
      %cst_18 = arith.constant dense<0xFF800000> : vector<8xf32>
      %25 = vector.multi_reduction <maximumf>, %24, %cst_18 [0] : vector<8x8xf32> to vector<8xf32>
      %26 = vector.shape_cast %25 : vector<8xf32> to vector<1x8xf32>
      %27 = vector.broadcast %26 : vector<1x8xf32> to vector<8x8xf32>
      %28 = arith.subf %24, %27 : vector<8x8xf32>
      %29 = math.exp %28 : vector<8x8xf32>
      %cst_19 = arith.constant dense<0.000000e+00> : vector<8xf32>
      %30 = vector.multi_reduction <add>, %29, %cst_19 [0] : vector<8x8xf32> to vector<8xf32>
      %31 = vector.shape_cast %30 : vector<8xf32> to vector<1x8xf32>
      %32 = tpu.reciprocal %31 : vector<1x8xf32> -> vector<1x8xf32>
      %33 = vector.broadcast %32 : vector<1x8xf32> to vector<8x8xf32>
      %34 = arith.mulf %29, %33 : vector<8x8xf32>
      %35 = arith.index_cast %arg12 : i32 to index
      %c0_20 = arith.constant 0 : index
      %c0_21 = arith.constant 0 : index
      %36 = vector.load %arg11[%35, %c0_20, %c0_21] : memref<2x8x16xf32, #tpu.memory_space<vmem>>, vector<1x8x16xf32>
      %37 = vector.shape_cast %36 : vector<1x8x16xf32> to vector<8x16xf32>
      %38 = arith.truncf %34 : vector<8x8xf32> to vector<8x8xbf16>
      %cst_22 = arith.constant dense<0.000000e+00> : vector<8x16xf32>
      %39 = tpu.matmul %38, %20, %cst_22 {dimension_numbers = #tpu.dot_dimension_numbers<[1], [0], [0], [1], [0, 0, 1, 1], [], []>} : vector<8x8xbf16>, vector<8x16xbf16>, vector<8x16xf32> -> vector<8x16xf32>
      %40 = arith.addf %37, %39 : vector<8x16xf32>
      %41 = arith.index_cast %arg12 : i32 to index
      %c0_23 = arith.constant 0 : index
      %c0_24 = arith.constant 0 : index
      %42 = vector.load %arg11[%41, %c0_23, %c0_24] : memref<2x8x16xf32, #tpu.memory_space<vmem>>, vector<1x8x16xf32>
      %43 = vector.shape_cast %42 : vector<1x8x16xf32> to vector<8x16xf32>
      %44 = vector.shape_cast %40 : vector<8x16xf32> to vector<1x8x16xf32>
      tpu.vector_store %arg11[%41, %c0_23, %c0_24], %44 {strides = array<i32>} : memref<2x8x16xf32, #tpu.memory_space<vmem>>, vector<1x8x16xf32>,
    }
    %c2_i32_7 = arith.constant 2 : i32
    %c0_i32_8 = arith.constant 0 : i32
    %8 = arith.cmpi eq, %arg1, %c0_i32_8 : i32
    %9 = arith.extui %8 : i1 to i32
    %c0_i32_9 = arith.constant 0 : i32
    %10 = arith.cmpi ne, %9, %c0_i32_9 : i32
    scf.if %10 {
      %cst = arith.constant 0.000000e+00 : f32
      %11 = vector.broadcast %cst : f32 to vector<8x32xf32>
      %c0_10 = arith.constant 0 : index
      %c0_11 = arith.constant 0 : index
      %c0_12 = arith.constant 0 : index
      %12 = vector.load %arg9[%c0_10, %c0_11, %c0_12] : memref<1x8x32xf32, #tpu.memory_space<vmem>>, vector<1x8x32xf32>
      %13 = vector.shape_cast %12 : vector<1x8x32xf32> to vector<8x32xf32>
      %14 = vector.shape_cast %11 : vector<8x32xf32> to vector<1x8x32xf32>
      tpu.vector_store %arg9[%c0_10, %c0_11, %c0_12], %14 {strides = array<i32>} : memref<1x8x32xf32, #tpu.memory_space<vmem>>, vector<1x8x32xf32>,
      %c0_i32_13 = arith.constant 0 : i32
      %c2_i32_14 = arith.constant 2 : i32
      %15 = arith.addi %c0_i32_13, %c2_i32_14 : i32
      %c1_i32_15 = arith.constant 1 : i32
      scf.for %arg12 = %c0_i32_13 to %15 step %c1_i32_15  : i32 {
        %16 = arith.index_cast %arg12 : i32 to index
        %c0_17 = arith.constant 0 : index
        %c0_18 = arith.constant 0 : index
        %17 = vector.load %arg11[%16, %c0_17, %c0_18] : memref<2x8x16xf32, #tpu.memory_space<vmem>>, vector<1x8x16xf32>
        %18 = vector.shape_cast %17 : vector<1x8x16xf32> to vector<8x16xf32>
        %19 = arith.truncf %18 : vector<8x16xf32> to vector<8x16xbf16>
        %20 = arith.index_cast %arg12 : i32 to index
        %c0_19 = arith.constant 0 : index
        %c0_20 = arith.constant 0 : index
        %21 = vector.load %arg8[%20, %c0_19, %c0_20] : memref<2x32x16xbf16, #tpu.memory_space<vmem>>, vector<1x32x16xbf16>
        %22 = vector.shape_cast %21 : vector<1x32x16xbf16> to vector<32x16xbf16>
        %cst_21 = arith.constant dense<0.000000e+00> : vector<8x32xf32>
        %23 = tpu.matmul %19, %22, %cst_21 {dimension_numbers = #tpu.dot_dimension_numbers<[1], [1], [0], [0], [0, 0, 1, 0], [], []>} : vector<8x16xbf16>, vector<32x16xbf16>, vector<8x32xf32> -> vector<8x32xf32>
        %c0_22 = arith.constant 0 : index
        %c0_23 = arith.constant 0 : index
        %c0_24 = arith.constant 0 : index
        %24 = vector.load %arg9[%c0_22, %c0_23, %c0_24] : memref<1x8x32xf32, #tpu.memory_space<vmem>>, vector<1x8x32xf32>
        %25 = vector.shape_cast %24 : vector<1x8x32xf32> to vector<8x32xf32>
        %26 = arith.addf %25, %23 : vector<8x32xf32>
        %c0_25 = arith.constant 0 : index
        %c0_26 = arith.constant 0 : index
        %c0_27 = arith.constant 0 : index
        %27 = vector.load %arg9[%c0_25, %c0_26, %c0_27] : memref<1x8x32xf32, #tpu.memory_space<vmem>>, vector<1x8x32xf32>
        %28 = vector.shape_cast %27 : vector<1x8x32xf32> to vector<8x32xf32>
        %29 = vector.shape_cast %26 : vector<8x32xf32> to vector<1x8x32xf32>
        tpu.vector_store %arg9[%c0_25, %c0_26, %c0_27], %29 {strides = array<i32>} : memref<1x8x32xf32, #tpu.memory_space<vmem>>, vector<1x8x32xf32>,
      }
      %c2_i32_16 = arith.constant 2 : i32
    } else {
    }
    return
  }
  func.func @transform_0(%arg0: i32, %arg1: i32) -> (i32, i32, i32) {
    %c0_i32 = arith.constant 0 : i32
    %c0_i32_0 = arith.constant 0 : i32
    %c0_i32_1 = arith.constant 0 : i32
    return %arg0, %c0_i32, %c0_i32_0 : i32, i32, i32
  }
  func.func @transform_1(%arg0: i32, %arg1: i32) -> (i32, i32, i32) {
    %c0_i32 = arith.constant 0 : i32
    %c0_i32_0 = arith.constant 0 : i32
    return %arg0, %arg1, %c0_i32 : i32, i32, i32
  }
  func.func @transform_2(%arg0: i32, %arg1: i32) -> (i32, i32, i32) {
    %c0_i32 = arith.constant 0 : i32
    %c0_i32_0 = arith.constant 0 : i32
    return %arg0, %arg1, %c0_i32 : i32, i32, i32
  }
  func.func @transform_3(%arg0: i32, %arg1: i32) -> (i32, i32, i32) {
    %c0_i32 = arith.constant 0 : i32
    %c0_i32_0 = arith.constant 0 : i32
    %c0_i32_1 = arith.constant 0 : i32
    %c0_i32_2 = arith.constant 0 : i32
    return %c0_i32, %c0_i32_0, %c0_i32_1 : i32, i32, i32
  }
  func.func @transform_4(%arg0: i32, %arg1: i32) -> (i32, i32, i32) {
    %c0_i32 = arith.constant 0 : i32
    %c0_i32_0 = arith.constant 0 : i32
    %c0_i32_1 = arith.constant 0 : i32
    %c0_i32_2 = arith.constant 0 : i32
    return %c0_i32, %c0_i32_0, %c0_i32_1 : i32, i32, i32
  }
  func.func @transform_5(%arg0: i32, %arg1: i32) -> (i32, i32, i32) {
    %c0_i32 = arith.constant 0 : i32
    %c0_i32_0 = arith.constant 0 : i32
    %c0_i32_1 = arith.constant 0 : i32
    %c0_i32_2 = arith.constant 0 : i32
    return %c0_i32, %c0_i32_0, %c0_i32_1 : i32, i32, i32
  }
  func.func @transform_6(%arg0: i32, %arg1: i32) -> (i32, i32, i32) {
    %c0_i32 = arith.constant 0 : i32
    %c0_i32_0 = arith.constant 0 : i32
    %c0_i32_1 = arith.constant 0 : i32
    %c0_i32_2 = arith.constant 0 : i32
    return %c0_i32, %c0_i32_0, %c0_i32_1 : i32, i32, i32
  }
  func.func @transform_7(%arg0: i32, %arg1: i32) -> (i32, i32, i32) {
    %c0_i32 = arith.constant 0 : i32
    %c0_i32_0 = arith.constant 0 : i32
    %c0_i32_1 = arith.constant 0 : i32
    return %arg0, %c0_i32, %c0_i32_0 : i32, i32, i32
  }
}

</mosaic_0001>

<llo_original>
// kernel: tpu_custom_call.1
$region0: #{tpu_custom_call.1}
  #allocation0 [shape = 'u32[]', space=smem, size = 0x4, offset = 0x4, fixed_abs, tag = 'smem constant byte address 0x4 - core index']
  #allocation1 [shape = 'u32[144,128]{1,0:T(1,128)}', space=vmem, size = 0x12000, scoped, tag = 'internal scratch']
  #allocation2 [shape = 'bf16[2,8,16]{2,1,0:T(8,128)(2,1)}', space=vmem, size = 0x1000, scoped, tag = 'scratch operand']
  #allocation3 [shape = 'f32[2,8,16]{2,1,0:T(8,128)}', space=vmem, size = 0x2000, scoped, tag = 'scratch operand']
  %s0 = inlined_call_operand.hbm [shape: bf16[2,8,32], index: 0, kind: input, shape index: {}]
  %s1 = inlined_call_operand.hbm [shape: bf16[2,8,32], index: 1, kind: input, shape index: {}]
  %s2 = inlined_call_operand.hbm [shape: bf16[2,8,32], index: 2, kind: input, shape index: {}]
  %s3 = inlined_call_operand.vmem [shape: bf16[2,16,32], index: 3, kind: input, shape index: {}]
  %s4 = inlined_call_operand.vmem [shape: bf16[2,16,32], index: 4, kind: input, shape index: {}]
  %s5 = inlined_call_operand.vmem [shape: bf16[2,16,32], index: 5, kind: input, shape index: {}]
  %s6 = inlined_call_operand.vmem [shape: bf16[2,32,16], index: 6, kind: input, shape index: {}]
  %s7 = inlined_call_operand.hbm [shape: f32[2,8,32], index: 7, kind: output, shape index: {}]
  %s8 = sld [smem:[#allocation0]]
  $region102: #{tpu_custom_call.1} parent=0
    _
  %s10 = ssub.s32 1, %s8
  %s11 = scalar_select 0, %s10, %s8
  $region1: #{tpu_custom_call.1} parent=0
    #allocation4 [shape = 'u8[4096]{0}', space=vmem, size = 0x1000, scoped, tag = 'input window, operand 0']
    #allocation5 [shape = 's32[2]{0}', space=sflag, size = 0x8, scoped, tag = 'scoped memory for tpu_custom_call.1']
    #allocation6 [shape = 's32[2]{0}', space=sflag, size = 0x8, scoped, tag = 'scoped memory for tpu_custom_call.1']
    #allocation7 [shape = 'u8[4096]{0}', space=vmem, size = 0x1000, scoped, tag = 'input window, operand 1']
    #allocation8 [shape = 's32[2]{0}', space=sflag, size = 0x8, scoped, tag = 'scoped memory for tpu_custom_call.1']
    #allocation9 [shape = 'u8[4096]{0}', space=vmem, size = 0x1000, scoped, tag = 'input window, operand 2']
    #allocation10 [shape = 'u8[8192]{0}', space=vmem, size = 0x2000, scoped, tag = 'output window, operand 0']
    %12 = vsyncpa [#allocation5], 0
    %s13 = scalar_lea.sflag [#allocation5], 1
    %14 = vsyncpa %s13, 0
    %15 = vsyncpa [#allocation8], 0
    %s16 = scalar_lea.sflag [#allocation8], 1
    %17 = vsyncpa %s16, 0
    %18 = vsyncpa [#allocation6], 0
    %s19 = scalar_lea.sflag [#allocation6], 1
    %20 = vsyncpa %s19, 0
    loop: start=0, step=1, limit=4
    $region2: #{tpu_custom_call.1} parent=1 // loop_pre_header
      _
    $region3: #{tpu_custom_call.1} parent=1 // loop_header
      %s22 = sphi 0, %s26
      %p23 = scmp.ge.s32.totalorder %s22, 4
      %s29 = sphi 0, %s41
      %s30 = sphi 0, %s37
      %s31 = sphi 0, %s29
      %s32 = sphi 0, %s30
      %s33 = sphi 0, %s31
      %s34 = sphi 0, %s32
      %s44 = sphi 0, %s46
      %s47 = sphi 0, %s44
      %s48 = sphi 0, %s47
      %s64 = sphi 0, %s48
      %s72 = sphi 0, %s74
      %s75 = sphi 0, %s72
      %s76 = sphi 0, %s75
      %s92 = sphi 0, %s76
      %s100 = sphi 0, %s102
      %s103 = sphi 0, %s100
      %s104 = sphi 0, %s103
      %s120 = sphi 0, %s104
      %s124 = sphi 0, %s124
      %s126 = sphi 0, %s124
      %s127 = sphi 0, %s126
      %s141 = sphi 0, %s127
      %s145 = sphi 0, %s145
      %s147 = sphi 0, %s145
      %s148 = sphi 0, %s147
      %s162 = sphi 0, %s148
      %s166 = sphi 0, %s166
      %s168 = sphi 0, %s166
      %s169 = sphi 0, %s168
      %s183 = sphi 0, %s169
      %s187 = sphi 0, %s187
      %s189 = sphi 0, %s187
      %s190 = sphi 0, %s189
      %s204 = sphi 0, %s190
      %s210 = sphi 0, %s212
      %s213 = sphi 0, %s210
      %s214 = sphi 0, %s213
      %s230 = sphi 0, %s214
    $region4: #{tpu_custom_call.1} parent=1 // loop_header_branch
      %25 = sbr.rel (%p23) target = $region8
    $region5: #{tpu_custom_call.1} parent=1 // loop_body
      %s27 = ssub.s32 %s22, 1
      %s28 = ssub.s32 %s22, 2
      %s35 = sadd.s32 1, %s30
      %p36 = scmp.ge.s32.totalorder %s35, 1
      %s37 = scalar_select %p36, 0, %s35
      %s38 = sadd.s32 1, %s29
      %s39 = scalar_select %p36, %s38, %s29
      %p40 = scmp.ge.s32.totalorder %s39, 2
      %s41 = scalar_select %p40, 0, %s39
      %s42 = ssub.s32 %s29, %s41
      %p43 = scmp.eq.s32.totalorder %s42, 0
      %s45 = sadd.s32 %s44, 1
      %s46 = scalar_select %p43, %s44, %s45
      %p49 = pneg %p43
      %p50 = scmp.eq.s32.totalorder %s22, 1
      %p51 = por %p49, %p50
      %p52 = scmp.ne.s32.totalorder %s44, %s47
      %p53 = scmp.eq.s32.totalorder %s22, 0
      %p54 = por %p52, %p53
      %p55 = scmp.ne.s32.totalorder %s44, %s47
      %p56 = scmp.eq.s32.totalorder %s27, 1
      %p57 = por %p55, %p56
      %p58 = scmp.ne.s32.totalorder %s47, %s48
      %p59 = scmp.eq.s32.totalorder %s27, 0
      %p60 = por %p58, %p59
      %p61 = scmp.ne.s32.totalorder %s47, %s48
      %p62 = scmp.eq.s32.totalorder %s28, 1
      %p63 = por %p61, %p62
      %p65 = scmp.ne.s32.totalorder %s48, %s64
      %p66 = scmp.eq.s32.totalorder %s28, 0
      %p67 = por %p65, %p66
      %s68 = ssub.s32 %s29, %s41
      %s69 = ssub.s32 %s30, %s37
      %s70 = sor.u32 %s68, %s69
      %p71 = scmp.eq.s32.totalorder %s70, 0
      %s73 = sadd.s32 %s72, 1
      %s74 = scalar_select %p71, %s72, %s73
      %p77 = pneg %p71
      %p78 = scmp.eq.s32.totalorder %s22, 1
      %p79 = por %p77, %p78
      %p80 = scmp.ne.s32.totalorder %s72, %s75
      %p81 = scmp.eq.s32.totalorder %s22, 0
      %p82 = por %p80, %p81
      %p83 = scmp.ne.s32.totalorder %s72, %s75
      %p84 = scmp.eq.s32.totalorder %s27, 1
      %p85 = por %p83, %p84
      %p86 = scmp.ne.s32.totalorder %s75, %s76
      %p87 = scmp.eq.s32.totalorder %s27, 0
      %p88 = por %p86, %p87
      %p89 = scmp.ne.s32.totalorder %s75, %s76
      %p90 = scmp.eq.s32.totalorder %s28, 1
      %p91 = por %p89, %p90
      %p93 = scmp.ne.s32.totalorder %s76, %s92
      %p94 = scmp.eq.s32.totalorder %s28, 0
      %p95 = por %p93, %p94
      %s96 = ssub.s32 %s29, %s41
      %s97 = ssub.s32 %s30, %s37
      %s98 = sor.u32 %s96, %s97
      %p99 = scmp.eq.s32.totalorder %s98, 0
      %s101 = sadd.s32 %s100, 1
      %s102 = scalar_select %p99, %s100, %s101
      %p105 = pneg %p99
      %p106 = scmp.eq.s32.totalorder %s22, 1
      %p107 = por %p105, %p106
      %p108 = scmp.ne.s32.totalorder %s100, %s103
      %p109 = scmp.eq.s32.totalorder %s22, 0
      %p110 = por %p108, %p109
      %p111 = scmp.ne.s32.totalorder %s100, %s103
      %p112 = scmp.eq.s32.totalorder %s27, 1
      %p113 = por %p111, %p112
      %p114 = scmp.ne.s32.totalorder %s103, %s104
      %p115 = scmp.eq.s32.totalorder %s27, 0
      %p116 = por %p114, %p115
      %p117 = scmp.ne.s32.totalorder %s103, %s104
      %p118 = scmp.eq.s32.totalorder %s28, 1
      %p119 = por %p117, %p118
      %p121 = scmp.ne.s32.totalorder %s104, %s120
      %p122 = scmp.eq.s32.totalorder %s28, 0
      %p123 = por %p121, %p122
      %s125 = sadd.s32 %s124, 1
      %p128 = scmp.eq.s32.totalorder %s22, 1
      %p129 = scmp.ne.s32.totalorder %s124, %s126
      %p130 = scmp.eq.s32.totalorder %s22, 0
      %p131 = por %p129, %p130
      %p132 = scmp.ne.s32.totalorder %s124, %s126
      %p133 = scmp.eq.s32.totalorder %s27, 1
      %p134 = por %p132, %p133
      %p135 = scmp.ne.s32.totalorder %s126, %s127
      %p136 = scmp.eq.s32.totalorder %s27, 0
      %p137 = por %p135, %p136
      %p138 = scmp.ne.s32.totalorder %s126, %s127
      %p139 = scmp.eq.s32.totalorder %s28, 1
      %p140 = por %p138, %p139
      %p142 = scmp.ne.s32.totalorder %s127, %s141
      %p143 = scmp.eq.s32.totalorder %s28, 0
      %p144 = por %p142, %p143
      %s146 = sadd.s32 %s145, 1
      %p149 = scmp.eq.s32.totalorder %s22, 1
      %p150 = scmp.ne.s32.totalorder %s145, %s147
      %p151 = scmp.eq.s32.totalorder %s22, 0
      %p152 = por %p150, %p151
      %p153 = scmp.ne.s32.totalorder %s145, %s147
      %p154 = scmp.eq.s32.totalorder %s27, 1
      %p155 = por %p153, %p154
      %p156 = scmp.ne.s32.totalorder %s147, %s148
      %p157 = scmp.eq.s32.totalorder %s27, 0
      %p158 = por %p156, %p157
      %p159 = scmp.ne.s32.totalorder %s147, %s148
      %p160 = scmp.eq.s32.totalorder %s28, 1
      %p161 = por %p159, %p160
      %p163 = scmp.ne.s32.totalorder %s148, %s162
      %p164 = scmp.eq.s32.totalorder %s28, 0
      %p165 = por %p163, %p164
      %s167 = sadd.s32 %s166, 1
      %p170 = scmp.eq.s32.totalorder %s22, 1
      %p171 = scmp.ne.s32.totalorder %s166, %s168
      %p172 = scmp.eq.s32.totalorder %s22, 0
      %p173 = por %p171, %p172
      %p174 = scmp.ne.s32.totalorder %s166, %s168
      %p175 = scmp.eq.s32.totalorder %s27, 1
      %p176 = por %p174, %p175
      %p177 = scmp.ne.s32.totalorder %s168, %s169
      %p178 = scmp.eq.s32.totalorder %s27, 0
      %p179 = por %p177, %p178
      %p180 = scmp.ne.s32.totalorder %s168, %s169
      %p181 = scmp.eq.s32.totalorder %s28, 1
      %p182 = por %p180, %p181
      %p184 = scmp.ne.s32.totalorder %s169, %s183
      %p185 = scmp.eq.s32.totalorder %s28, 0
      %p186 = por %p184, %p185
      %s188 = sadd.s32 %s187, 1
      %p191 = scmp.eq.s32.totalorder %s22, 1
      %p192 = scmp.ne.s32.totalorder %s187, %s189
      %p193 = scmp.eq.s32.totalorder %s22, 0
      %p194 = por %p192, %p193
      %p195 = scmp.ne.s32.totalorder %s187, %s189
      %p196 = scmp.eq.s32.totalorder %s27, 1
      %p197 = por %p195, %p196
      %p198 = scmp.ne.s32.totalorder %s189, %s190
      %p199 = scmp.eq.s32.totalorder %s27, 0
      %p200 = por %p198, %p199
      %p201 = scmp.ne.s32.totalorder %s189, %s190
      %p202 = scmp.eq.s32.totalorder %s28, 1
      %p203 = por %p201, %p202
      %p205 = scmp.ne.s32.totalorder %s190, %s204
      %p206 = scmp.eq.s32.totalorder %s28, 0
      %p207 = por %p205, %p206
      %s208 = ssub.s32 %s29, %s41
      %p209 = scmp.eq.s32.totalorder %s208, 0
      %s211 = sadd.s32 %s210, 1
      %s212 = scalar_select %p209, %s210, %s211
      %p215 = pneg %p209
      %p216 = scmp.eq.s32.totalorder %s22, 1
      %p217 = por %p215, %p216
      %p218 = scmp.ne.s32.totalorder %s210, %s213
      %p219 = scmp.eq.s32.totalorder %s22, 0
      %p220 = por %p218, %p219
      %p221 = scmp.ne.s32.totalorder %s210, %s213
      %p222 = scmp.eq.s32.totalorder %s27, 1
      %p223 = por %p221, %p222
      %p224 = scmp.ne.s32.totalorder %s213, %s214
      %p225 = scmp.eq.s32.totalorder %s27, 0
      %p226 = por %p224, %p225
      %p227 = scmp.ne.s32.totalorder %s213, %s214
      %p228 = scmp.eq.s32.totalorder %s28, 1
      %p229 = por %p227, %p228
      %p231 = scmp.ne.s32.totalorder %s214, %s230
      %p232 = scmp.eq.s32.totalorder %s28, 0
      %p233 = por %p231, %p232
      %p234 = scmp.le.s32.totalorder 1, %s22
      %p235 = scmp.lt.s32.totalorder %s22, 3
      %p236 = pnand %p234, %p235
      %p237 = pneg %p236
      // Predicated region
      $region9: #{tpu_custom_call.1} parent=5 // pred_check
        _
      $region10: #{tpu_custom_call.1} parent=5 // pred_check_branch
        %239 = sbr.rel (%p236) target = $region12
      $region11: #{tpu_custom_call.1} parent=5 // pred_region
        %s240 = ssub.s32 %s22, 1
        // Predicated region
        $region13: #{tpu_custom_call.1} parent=11 // pred_check
          %p241 = pneg %p137
        $region14: #{tpu_custom_call.1} parent=11 // pred_check_branch
          %243 = sbr.rel (%p241) target = $region16
        $region15: #{tpu_custom_call.1} parent=11 // pred_region
          _
        $region16: #{tpu_custom_call.1} parent=11 // pred_fallthru
          _
        // Predicated region
        $region17: #{tpu_custom_call.1} parent=11 // pred_check
          %p244 = pneg %p158
        $region18: #{tpu_custom_call.1} parent=11 // pred_check_branch
          %246 = sbr.rel (%p244) target = $region20
        $region19: #{tpu_custom_call.1} parent=11 // pred_region
          _
        $region20: #{tpu_custom_call.1} parent=11 // pred_fallthru
          _
        // Predicated region
        $region21: #{tpu_custom_call.1} parent=11 // pred_check
          %p247 = pneg %p179
        $region22: #{tpu_custom_call.1} parent=11 // pred_check_branch
          %249 = sbr.rel (%p247) target = $region24
        $region23: #{tpu_custom_call.1} parent=11 // pred_region
          _
        $region24: #{tpu_custom_call.1} parent=11 // pred_fallthru
          _
        // Predicated region
        $region25: #{tpu_custom_call.1} parent=11 // pred_check
          %p250 = pneg %p200
        $region26: #{tpu_custom_call.1} parent=11 // pred_check_branch
          %252 = sbr.rel (%p250) target = $region28
        $region27: #{tpu_custom_call.1} parent=11 // pred_region
          _
        $region28: #{tpu_custom_call.1} parent=11 // pred_fallthru
          _
      $region12: #{tpu_custom_call.1} parent=5 // pred_fallthru
        _
      %p253 = scmp.lt.s32.totalorder %s22, 2
      // Predicated region
      $region29: #{tpu_custom_call.1} parent=5 // pred_check
        %p254 = pneg %p253
      $region30: #{tpu_custom_call.1} parent=5 // pred_check_branch
        %256 = sbr.rel (%p254) target = $region32
      $region31: #{tpu_custom_call.1} parent=5 // pred_region
        // Predicated region
        $region33: #{tpu_custom_call.1} parent=31 // pred_check
          %p257 = pneg %p54
        $region34: #{tpu_custom_call.1} parent=31 // pred_check_branch
          %259 = sbr.rel (%p257) target = $region36
        $region35: #{tpu_custom_call.1} parent=31 // pred_region
          %s260 = sand.u32 %s44, 1
          %s261 = scalar_lea.sflag [#allocation5], %s260
          %s262 = sand.u32 %s44, 1
          %s263 = smul.addr %s262, 4
          %s264 = scalar_lea.vmem [#allocation4], %s263
          %s266 = ssub.s32 64, 64
          %267 = vsyncadd %s261, %s266
          %s268 = smul.addr %s29, 64
          %s269 = scalar_lea.hbm %s0, %s268
          %s271 = sshll.u32 %s264, 4
          %s272 = int_to_ptr.vmem [resolvable:$true] %s271
          %274 = dma.hbm_to_vmem [thread:$0]  %s269, 64, %s272, %s261
        $region36: #{tpu_custom_call.1} parent=31 // pred_fallthru
          _
        // Predicated region
        $region37: #{tpu_custom_call.1} parent=31 // pred_check
          %p275 = pneg %p82
        $region38: #{tpu_custom_call.1} parent=31 // pred_check_branch
          %277 = sbr.rel (%p275) target = $region40
        $region39: #{tpu_custom_call.1} parent=31 // pred_region
          %s278 = sand.u32 %s22, 1
          %s279 = scalar_lea.sflag [#allocation8], %s278
          %s280 = sand.u32 %s72, 1
          %s281 = smul.addr %s280, 4
          %s282 = scalar_lea.vmem [#allocation7], %s281
          %s284 = ssub.s32 64, 64
          %285 = vsyncadd %s279, %s284
          %s286 = sadd.s32 %s30, %s29
          %s287 = smul.addr %s286, 64
          %s288 = scalar_lea.hbm %s1, %s287
          %s290 = sshll.u32 %s282, 4
          %s291 = int_to_ptr.vmem [resolvable:$true] %s290
          %293 = dma.hbm_to_vmem [thread:$0]  %s288, 64, %s291, %s279
        $region40: #{tpu_custom_call.1} parent=31 // pred_fallthru
          _
        // Predicated region
        $region41: #{tpu_custom_call.1} parent=31 // pred_check
          %p294 = pneg %p110
        $region42: #{tpu_custom_call.1} parent=31 // pred_check_branch
          %296 = sbr.rel (%p294) target = $region44
        $region43: #{tpu_custom_call.1} parent=31 // pred_region
          %s297 = sand.u32 %s22, 1
          %s298 = scalar_lea.sflag [#allocation8], %s297
          %s299 = sand.u32 %s100, 1
          %s300 = smul.addr %s299, 4
          %s301 = scalar_lea.vmem [#allocation9], %s300
          %s303 = ssub.s32 64, 64
          %304 = vsyncadd %s298, %s303
          %s305 = sadd.s32 %s30, %s29
          %s306 = smul.addr %s305, 64
          %s307 = scalar_lea.hbm %s2, %s306
          %s309 = sshll.u32 %s301, 4
          %s310 = int_to_ptr.vmem [resolvable:$true] %s309
          %312 = dma.hbm_to_vmem [thread:$0]  %s307, 64, %s310, %s298
        $region44: #{tpu_custom_call.1} parent=31 // pred_fallthru
          _
      $region32: #{tpu_custom_call.1} parent=5 // pred_fallthru
        _
      %p313 = scmp.le.s32.totalorder 1, %s22
      %p314 = scmp.lt.s32.totalorder %s22, 3
      %p315 = pnand %p313, %p314
      %p316 = pneg %p315
      // Predicated region
      $region45: #{tpu_custom_call.1} parent=5 // pred_check
        _
      $region46: #{tpu_custom_call.1} parent=5 // pred_check_branch
        %318 = sbr.rel (%p315) target = $region48
      $region47: #{tpu_custom_call.1} parent=5 // pred_region
        %s319 = ssub.s32 %s22, 1
        %s320 = sand.u32 %s47, 1
        %s321 = scalar_lea.sflag [#allocation5], %s320
        %s322 = sand.u32 %s47, 1
        %s323 = smul.addr %s322, 4
        %s324 = scalar_lea.vmem [#allocation4], %s323
        // Predicated region
        $region49: #{tpu_custom_call.1} parent=47 // pred_check
          %p325 = pneg %p60
        $region50: #{tpu_custom_call.1} parent=47 // pred_check_branch
          %327 = sbr.rel (%p325) target = $region52
        $region51: #{tpu_custom_call.1} parent=47 // pred_region
          %328 = dma.done %s321, 64
        $region52: #{tpu_custom_call.1} parent=47 // pred_fallthru
          _
        %s329 = sand.u32 %s27, 1
        %s330 = scalar_lea.sflag [#allocation8], %s329
        %s331 = sand.u32 %s75, 1
        %s332 = smul.addr %s331, 4
        %s333 = scalar_lea.vmem [#allocation7], %s332
        // Predicated region
        $region53: #{tpu_custom_call.1} parent=47 // pred_check
          %p334 = pneg %p88
        $region54: #{tpu_custom_call.1} parent=47 // pred_check_branch
          %336 = sbr.rel (%p334) target = $region56
        $region55: #{tpu_custom_call.1} parent=47 // pred_region
          %337 = dma.done %s330, 64
        $region56: #{tpu_custom_call.1} parent=47 // pred_fallthru
          _
        %s338 = sand.u32 %s27, 1
        %s339 = scalar_lea.sflag [#allocation8], %s338
        %s340 = sand.u32 %s103, 1
        %s341 = smul.addr %s340, 4
        %s342 = scalar_lea.vmem [#allocation9], %s341
        // Predicated region
        $region57: #{tpu_custom_call.1} parent=47 // pred_check
          %p343 = pneg %p116
        $region58: #{tpu_custom_call.1} parent=47 // pred_check_branch
          %345 = sbr.rel (%p343) target = $region60
        $region59: #{tpu_custom_call.1} parent=47 // pred_region
          %346 = dma.done %s339, 64
        $region60: #{tpu_custom_call.1} parent=47 // pred_fallthru
          _
        %s347 = sand.u32 %s47, 1
        %s348 = scalar_lea.sflag [#allocation5], %s347
        %s349 = sand.u32 %s47, 1
        %s350 = smul.addr %s349, 4
        %s351 = scalar_lea.vmem [#allocation4], %s350
        %p352 = pneg %p60
        %p353 = pneg %p57
        %s354 = sand.u32 %s27, 1
        %s355 = scalar_lea.sflag [#allocation8], %s354
        %s356 = sand.u32 %s75, 1
        %s357 = smul.addr %s356, 4
        %s358 = scalar_lea.vmem [#allocation7], %s357
        %p359 = pneg %p88
        %p360 = pneg %p85
        %s361 = sand.u32 %s27, 1
        %s362 = scalar_lea.sflag [#allocation8], %s361
        %s363 = sand.u32 %s103, 1
        %s364 = smul.addr %s363, 4
        %s365 = scalar_lea.vmem [#allocation9], %s364
        %p366 = pneg %p116
        %p367 = pneg %p113
        %p368 = pneg %p137
        %p369 = pneg %p134
        %p370 = pneg %p158
        %p371 = pneg %p155
        %p372 = pneg %p179
        %p373 = pneg %p176
        %p374 = pneg %p200
        %p375 = pneg %p197
        %p376 = pneg %p226
        %p377 = pneg %p223
        %s378 = sand.u32 %s213, 1
        %s379 = scalar_lea.sflag [#allocation6], %s378
        %s380 = sand.u32 %s213, 1
        %s381 = smul.addr %s380, 8
        %s382 = scalar_lea.vmem [#allocation10], %s381
        %p384 = scmp.eq.s32.totalorder %s32, 0
        // Predicated region
        $region61: #{tpu_custom_call.1} parent=47 // pred_check
          %p385 = pneg %p384
        $region62: #{tpu_custom_call.1} parent=47 // pred_check_branch
          %387 = sbr.rel (%p385) target = $region64
        $region63: #{tpu_custom_call.1} parent=47 // pred_region
          %v388 = vld [vmem:[%s324] sm:$0xf]
          loop: start=0, step=1, limit=2
          $region65: #{tpu_custom_call.1} parent=63 // loop_pre_header
            _
          $region66: #{tpu_custom_call.1} parent=63 // loop_header
            %s390 = sphi 0, %s394
            %p391 = scmp.ge.s32.totalorder %s390, 2
          $region67: #{tpu_custom_call.1} parent=63 // loop_header_branch
            %393 = sbr.rel (%p391) target = $region71
          $region68: #{tpu_custom_call.1} parent=63 // loop_body
            %s395 = smul.u32 %s390, 2
            %s396 = smul.addr %s395, 4
            %s397 = scalar_lea.vmem %s3, %s396
            %v398 = vld [vmem:[%s397] sm:$0xf]
            %v399 = vld [vmem:[%s397 + $0x4] sm:$0xf]
            %v402 = vunpack.c.l.b16 %v398
            %v403 = vunpack.c.l.b16 %v399
            %v404 = vpack.c.b16 %v403, %v402
            %vm405 = vcmask 261120
            %v407 = vsel %vm405, %v388, 0
            %v410 = vsel %vm405, %v404, 0
            %412 = vmatprep.subr.bf16.mxu0 0
            %413 = vmatpush1.bf16.xpose.msra.mxu0 0
            %414 = vmatprep.subr.bf16.mxu0 0
            %415 = vmatpush1.bf16.xpose.msra.mxu0 0
            %416 = vmatprep.subr.bf16.mxu0 0
            %417 = vmatpush1.bf16.xpose.msra.mxu0 0
            %418 = vmatprep.subr.bf16.mxu0 0
            %419 = vmatpush1.bf16.xpose.msra.mxu0 0
            %420 = vmatprep.subr.bf16.mxu0 0
            %421 = vmatpush1.bf16.xpose.msra.mxu0 0
            %422 = vmatprep.subr.bf16.mxu0 0
            %423 = vmatpush1.bf16.xpose.msra.mxu0 0
            %424 = vmatprep.subr.bf16.mxu0 0
            %425 = vmatpush1.bf16.xpose.msra.mxu0 0
            %426 = vmatprep.subr.bf16.mxu0 0
            %427 = vmatpush1.bf16.xpose.msra.mxu0 %v410
            %428 = vmatprep.subr.bf16.mxu0 0
            %429 = vmatpush2.bf16.xpose.msra.mxu0 0
            %430 = vmatprep.subr.bf16.mxu0 0
            %431 = vmatpush2.bf16.xpose.msra.mxu0 0
            %432 = vmatprep.subr.bf16.mxu0 0
            %433 = vmatpush2.bf16.xpose.msra.mxu0 0
            %434 = vmatprep.subr.bf16.mxu0 0
            %435 = vmatpush2.bf16.xpose.msra.mxu0 0
            %436 = vmatprep.subr.bf16.mxu0 0
            %437 = vmatpush2.bf16.xpose.msra.mxu0 0
            %438 = vmatprep.subr.bf16.mxu0 0
            %439 = vmatpush2.bf16.xpose.msra.mxu0 0
            %440 = vmatprep.subr.bf16.mxu0 0
            %441 = vmatpush2.bf16.xpose.msra.mxu0 0
            %442 = vmatprep.subr.bf16.mxu0 0
            %443 = vmatpush2.bf16.xpose.msra.mxu0 0
            %444 = vmatprep.mubr.bf16.mxu0 0
            %445 = vmatmul.mubr.bf16.gmra.mxu0 %v407
            %v446 = vpop.f32.mrf.mxu0
            %v447 = vadd.f32 0.0, %v446
            %v448 = vpop.f32.mrf.mxu0
            %v449 = vpop.f32.mrf.mxu0
            %v450 = vpop.f32.mrf.mxu0
            %451 = vdwg.mxu0
            %v452 = vmul.f32 %v447, 0.25
            %v453 = vpack.c.bf16 %v452, %v452
            %s454 = smul.addr %s390, 4
            %s455 = scalar_lea.vmem [#allocation2], %s454
            %vm456 = vcmask 125952
            %457 = vst.msk [vmem:[%s455] sm:$0xf] %vm456, %v453
          $region69: #{tpu_custom_call.1} parent=63 // loop_footer
            %s394 = sadd.s32 1, %s390
          $region70: #{tpu_custom_call.1} parent=63 // loop_footer_branch
            %389 = sbr.rel target = $region66
          $region71: #{tpu_custom_call.1} parent=63 // loop_exit
            _
          %vm458 = vcmask 130048
          %459 = vst.msk [vmem:[#allocation3] sm:$0xff] %vm458, 0.0
          %460 = vst.msk [vmem:[#allocation3 + $0x8] sm:$0xff] %vm458, 0.0
        $region64: #{tpu_custom_call.1} parent=47 // pred_fallthru
          _
        %v461 = vld [vmem:[%s333] sm:$0xf]
        %v462 = vld [vmem:[%s342] sm:$0xf]
        loop: start=0, step=1, limit=2
        $region72: #{tpu_custom_call.1} parent=47 // loop_pre_header
          _
        $region73: #{tpu_custom_call.1} parent=47 // loop_header
          %s464 = sphi 0, %s468
          %p465 = scmp.ge.s32.totalorder %s464, 2
        $region74: #{tpu_custom_call.1} parent=47 // loop_header_branch
          %467 = sbr.rel (%p465) target = $region78
        $region75: #{tpu_custom_call.1} parent=47 // loop_body
          %s469 = smul.u32 %s464, 2
          %s470 = smul.addr %s469, 4
          %s471 = scalar_lea.vmem %s4, %s470
          %v472 = vld [vmem:[%s471] sm:$0xf]
          %v473 = vld [vmem:[%s471 + $0x4] sm:$0xf]
          %v476 = vunpack.c.l.b16 %v472
          %v477 = vunpack.c.l.b16 %v473
          %v478 = vpack.c.b16 %v477, %v476
          %vm479 = vcmask 261120
          %v481 = vsel %vm479, %v461, 0
          %v484 = vsel %vm479, %v478, 0
          %486 = vmatprep.subr.bf16.mxu0 0
          %487 = vmatpush1.bf16.xpose.msra.mxu0 0
          %488 = vmatprep.subr.bf16.mxu0 0
          %489 = vmatpush1.bf16.xpose.msra.mxu0 0
          %490 = vmatprep.subr.bf16.mxu0 0
          %491 = vmatpush1.bf16.xpose.msra.mxu0 0
          %492 = vmatprep.subr.bf16.mxu0 0
          %493 = vmatpush1.bf16.xpose.msra.mxu0 0
          %494 = vmatprep.subr.bf16.mxu0 0
          %495 = vmatpush1.bf16.xpose.msra.mxu0 0
          %496 = vmatprep.subr.bf16.mxu0 0
          %497 = vmatpush1.bf16.xpose.msra.mxu0 0
          %498 = vmatprep.subr.bf16.mxu0 0
          %499 = vmatpush1.bf16.xpose.msra.mxu0 0
          %500 = vmatprep.subr.bf16.mxu0 0
          %501 = vmatpush1.bf16.xpose.msra.mxu0 %v484
          %502 = vmatprep.subr.bf16.mxu0 0
          %503 = vmatpush2.bf16.xpose.msra.mxu0 0
          %504 = vmatprep.subr.bf16.mxu0 0
          %505 = vmatpush2.bf16.xpose.msra.mxu0 0
          %506 = vmatprep.subr.bf16.mxu0 0
          %507 = vmatpush2.bf16.xpose.msra.mxu0 0
          %508 = vmatprep.subr.bf16.mxu0 0
          %509 = vmatpush2.bf16.xpose.msra.mxu0 0
          %510 = vmatprep.subr.bf16.mxu0 0
          %511 = vmatpush2.bf16.xpose.msra.mxu0 0
          %512 = vmatprep.subr.bf16.mxu0 0
          %513 = vmatpush2.bf16.xpose.msra.mxu0 0
          %514 = vmatprep.subr.bf16.mxu0 0
          %515 = vmatpush2.bf16.xpose.msra.mxu0 0
          %516 = vmatprep.subr.bf16.mxu0 0
          %517 = vmatpush2.bf16.xpose.msra.mxu0 0
          %518 = vmatprep.mubr.bf16.mxu0 0
          %519 = vmatmul.mubr.bf16.gmra.mxu0 %v481
          %v520 = vpop.f32.mrf.mxu0
          %v521 = vadd.f32 0.0, %v520
          %v522 = vpop.f32.mrf.mxu0
          %v523 = vpop.f32.mrf.mxu0
          %v524 = vpop.f32.mrf.mxu0
          %525 = vdwg.mxu0
          %v526 = vpack.c.bf16 %v521, %v521
          %s527 = smul.addr %s469, 4
          %s528 = scalar_lea.vmem %s5, %s527
          %v529 = vld [vmem:[%s528] sm:$0xf]
          %v530 = vld [vmem:[%s528 + $0x4] sm:$0xf]
          %v533 = vunpack.c.l.b16 %v529
          %v534 = vunpack.c.l.b16 %v530
          %v535 = vpack.c.b16 %v534, %v533
          %v537 = vsel %vm479, %v462, 0
          %v540 = vsel %vm479, %v535, 0
          %542 = vmatprep.subr.bf16.mxu0 0
          %543 = vmatpush1.bf16.xpose.msra.mxu0 0
          %544 = vmatprep.subr.bf16.mxu0 0
          %545 = vmatpush1.bf16.xpose.msra.mxu0 0
          %546 = vmatprep.subr.bf16.mxu0 0
          %547 = vmatpush1.bf16.xpose.msra.mxu0 0
          %548 = vmatprep.subr.bf16.mxu0 0
          %549 = vmatpush1.bf16.xpose.msra.mxu0 0
          %550 = vmatprep.subr.bf16.mxu0 0
          %551 = vmatpush1.bf16.xpose.msra.mxu0 0
          %552 = vmatprep.subr.bf16.mxu0 0
          %553 = vmatpush1.bf16.xpose.msra.mxu0 0
          %554 = vmatprep.subr.bf16.mxu0 0
          %555 = vmatpush1.bf16.xpose.msra.mxu0 0
          %556 = vmatprep.subr.bf16.mxu0 0
          %557 = vmatpush1.bf16.xpose.msra.mxu0 %v540
          %558 = vmatprep.subr.bf16.mxu0 0
          %559 = vmatpush2.bf16.xpose.msra.mxu0 0
          %560 = vmatprep.subr.bf16.mxu0 0
          %561 = vmatpush2.bf16.xpose.msra.mxu0 0
          %562 = vmatprep.subr.bf16.mxu0 0
          %563 = vmatpush2.bf16.xpose.msra.mxu0 0
          %564 = vmatprep.subr.bf16.mxu0 0
          %565 = vmatpush2.bf16.xpose.msra.mxu0 0
          %566 = vmatprep.subr.bf16.mxu0 0
          %567 = vmatpush2.bf16.xpose.msra.mxu0 0
          %568 = vmatprep.subr.bf16.mxu0 0
          %569 = vmatpush2.bf16.xpose.msra.mxu0 0
          %570 = vmatprep.subr.bf16.mxu0 0
          %571 = vmatpush2.bf16.xpose.msra.mxu0 0
          %572 = vmatprep.subr.bf16.mxu0 0
          %573 = vmatpush2.bf16.xpose.msra.mxu0 0
          %574 = vmatprep.mubr.bf16.mxu0 0
          %575 = vmatmul.mubr.bf16.gmra.mxu0 %v537
          %v576 = vpop.f32.mrf.mxu0
          %v577 = vadd.f32 0.0, %v576
          %v578 = vpop.f32.mrf.mxu0
          %v579 = vpop.f32.mrf.mxu0
          %v580 = vpop.f32.mrf.mxu0
          %581 = vdwg.mxu0
          %v582 = vpack.c.bf16 %v577, %v577
          %s583 = smul.addr %s464, 4
          %s584 = scalar_lea.vmem [#allocation2], %s583
          %v585 = vld [vmem:[%s584] sm:$0xf]
          %vm586 = vcmask 130048
          %v588 = vsel %vm586, %v585, 0
          %v591 = vsel %vm586, %v526, 0
          %593 = vmatprep.subr.bf16.mxu0 0
          %594 = vmatpush1.bf16.xpose.msra.mxu0 0
          %595 = vmatprep.subr.bf16.mxu0 0
          %596 = vmatpush1.bf16.xpose.msra.mxu0 0
          %597 = vmatprep.subr.bf16.mxu0 0
          %598 = vmatpush1.bf16.xpose.msra.mxu0 0
          %599 = vmatprep.subr.bf16.mxu0 0
          %600 = vmatpush1.bf16.xpose.msra.mxu0 0
          %601 = vmatprep.subr.bf16.mxu0 0
          %602 = vmatpush1.bf16.xpose.msra.mxu0 0
          %603 = vmatprep.subr.bf16.mxu0 0
          %604 = vmatpush1.bf16.xpose.msra.mxu0 0
          %605 = vmatprep.subr.bf16.mxu0 0
          %606 = vmatpush1.bf16.xpose.msra.mxu0 0
          %607 = vmatprep.subr.bf16.mxu0 0
          %608 = vmatpush1.bf16.xpose.msra.mxu0 %v591
          %609 = vmatprep.subr.bf16.mxu0 0
          %610 = vmatpush2.bf16.xpose.msra.mxu0 0
          %611 = vmatprep.subr.bf16.mxu0 0
          %612 = vmatpush2.bf16.xpose.msra.mxu0 0
          %613 = vmatprep.subr.bf16.mxu0 0
          %614 = vmatpush2.bf16.xpose.msra.mxu0 0
          %615 = vmatprep.subr.bf16.mxu0 0
          %616 = vmatpush2.bf16.xpose.msra.mxu0 0
          %617 = vmatprep.subr.bf16.mxu0 0
          %618 = vmatpush2.bf16.xpose.msra.mxu0 0
          %619 = vmatprep.subr.bf16.mxu0 0
          %620 = vmatpush2.bf16.xpose.msra.mxu0 0
          %621 = vmatprep.subr.bf16.mxu0 0
          %622 = vmatpush2.bf16.xpose.msra.mxu0 0
          %623 = vmatprep.subr.bf16.mxu0 0
          %624 = vmatpush2.bf16.xpose.msra.mxu0 0
          %625 = vmatprep.mubr.bf16.mxu0 0
          %626 = vmatmul.mubr.bf16.gmra.mxu0 %v588
          %v627 = vpop.f32.mrf.mxu0
          %v628 = vadd.f32 0.0, %v627
          %v629 = vpop.f32.mrf.mxu0
          %v630 = vpop.f32.mrf.mxu0
          %v631 = vpop.f32.mrf.mxu0
          %632 = vdwg.mxu0
          %vm633 = vcmask 64512
          %v634 = vsel %vm633, %v628, -inf
          %v635 = vrot.slane %v634, 4
          %v636 = vmax.f32 %v634, %v635
          %v637 = vrot.slane %v636, 2
          %v638 = vmax.f32 %v636, %v637
          %v639 = vrot.slane %v638, 1
          %v640 = vmax.f32 %v638, %v639
          %v641 = vsub.f32 %v628, %v640
          %v642 = vmul.f32 %v641, 1.442695
          %v643 = vpow.pop %v642
          %v644 = vsel %vm633, %v643, 0.0
          %v645 = vrot.slane %v644, 4
          %v646 = vadd.f32 %v644, %v645
          %v647 = vrot.slane %v646, 2
          %v648 = vadd.f32 %v646, %v647
          %v649 = vrot.slane %v648, 1
          %v650 = vadd.f32 %v648, %v649
          %v651 = vrcp.pop %v650
          %v652 = vmul.f32 %v643, %v651
          %s653 = smul.u32 %s464, 8
          %s654 = scalar_lea.vmem [#allocation3], %s653
          %v655 = vld [vmem:[%s654] sm:$0xff]
          %v656 = vpack.c.bf16 %v652, %v652
          %v658 = vsel %vm633, %v656, 0
          %vm660 = vcmask 1043456
          %v662 = vsel %vm660, %v582, 0
          %664 = vmatprep.subr.bf16.mxu0 0
          %665 = vmatpush1.bf16.msra.mxu0 0
          %666 = vmatprep.subr.bf16.mxu0 0
          %667 = vmatpush1.bf16.msra.mxu0 0
          %668 = vmatprep.subr.bf16.mxu0 0
          %669 = vmatpush1.bf16.msra.mxu0 0
          %670 = vmatprep.subr.bf16.mxu0 0
          %671 = vmatpush1.bf16.msra.mxu0 0
          %672 = vmatprep.subr.bf16.mxu0 0
          %673 = vmatpush1.bf16.msra.mxu0 0
          %674 = vmatprep.subr.bf16.mxu0 0
          %675 = vmatpush1.bf16.msra.mxu0 0
          %676 = vmatprep.subr.bf16.mxu0 0
          %677 = vmatpush1.bf16.msra.mxu0 0
          %678 = vmatprep.subr.bf16.mxu0 0
          %679 = vmatpush1.bf16.msra.mxu0 %v662
          %680 = vmatprep.subr.bf16.mxu0 0
          %681 = vmatpush2.bf16.msra.mxu0 0
          %682 = vmatprep.subr.bf16.mxu0 0
          %683 = vmatpush2.bf16.msra.mxu0 0
          %684 = vmatprep.subr.bf16.mxu0 0
          %685 = vmatpush2.bf16.msra.mxu0 0
          %686 = vmatprep.subr.bf16.mxu0 0
          %687 = vmatpush2.bf16.msra.mxu0 0
          %688 = vmatprep.subr.bf16.mxu0 0
          %689 = vmatpush2.bf16.msra.mxu0 0
          %690 = vmatprep.subr.bf16.mxu0 0
          %691 = vmatpush2.bf16.msra.mxu0 0
          %692 = vmatprep.subr.bf16.mxu0 0
          %693 = vmatpush2.bf16.msra.mxu0 0
          %694 = vmatprep.subr.bf16.mxu0 0
          %695 = vmatpush2.bf16.msra.mxu0 0
          %696 = vmatprep.mubr.bf16.mxu0 0
          %697 = vmatmul.mubr.bf16.gmra.mxu0 %v658
          %v698 = vpop.f32.mrf.mxu0
          %v699 = vadd.f32 0.0, %v698
          %v700 = vpop.f32.mrf.mxu0
          %v701 = vpop.f32.mrf.mxu0
          %v702 = vpop.f32.mrf.mxu0
          %703 = vdwg.mxu0
          %v704 = vadd.f32 %v655, %v699
          %705 = vst.msk [vmem:[%s654] sm:$0xff] %vm586, %v704
        $region76: #{tpu_custom_call.1} parent=47 // loop_footer
          %s468 = sadd.s32 1, %s464
        $region77: #{tpu_custom_call.1} parent=47 // loop_footer_branch
          %463 = sbr.rel target = $region73
        $region78: #{tpu_custom_call.1} parent=47 // loop_exit
          _
        // Predicated region
        $region79: #{tpu_custom_call.1} parent=47 // pred_check
          %p706 = pneg %p384
        $region80: #{tpu_custom_call.1} parent=47 // pred_check_branch
          %708 = sbr.rel (%p706) target = $region82
        $region81: #{tpu_custom_call.1} parent=47 // pred_region
          %vm709 = vcmask 261120
          %710 = vst.msk [vmem:[%s382] sm:$0xff] %vm709, 0.0
          loop: start=0, step=1, limit=2
          $region83: #{tpu_custom_call.1} parent=81 // loop_pre_header
            _
          $region84: #{tpu_custom_call.1} parent=81 // loop_header
            %s712 = sphi 0, %s716
            %p713 = scmp.ge.s32.totalorder %s712, 2
          $region85: #{tpu_custom_call.1} parent=81 // loop_header_branch
            %715 = sbr.rel (%p713) target = $region89
          $region86: #{tpu_custom_call.1} parent=81 // loop_body
            %s717 = smul.u32 %s712, 8
            %s718 = scalar_lea.vmem [#allocation3], %s717
            %v719 = vld [vmem:[%s718] sm:$0xff]
            %v720 = vpack.c.bf16 %v719, %v719
            %s721 = smul.u32 %s712, 4
            %s722 = smul.addr %s721, 4
            %s723 = scalar_lea.vmem %s6, %s722
            %v724 = vld [vmem:[%s723] sm:$0xf]
            %v725 = vld [vmem:[%s723 + $0x4] sm:$0xf]
            %v726 = vld [vmem:[%s723 + $0x8] sm:$0xf]
            %v727 = vld [vmem:[%s723 + $0xc] sm:$0xf]
            %v732 = vunpack.c.l.b16 %v724
            %v733 = vunpack.c.l.b16 %v725
            %v734 = vunpack.c.l.b16 %v726
            %v735 = vunpack.c.l.b16 %v727
            %v736 = vpack.c.b16 %v733, %v732
            %v737 = vpack.c.b16 %v735, %v734
            %vm738 = vcmask 130048
            %v740 = vsel %vm738, %v720, 0
            %v743 = vsel %vm738, %v736, 0
            %v746 = vsel %vm738, %v737, 0
            %748 = vmatprep.subr.bf16.mxu0 0
            %749 = vmatpush1.bf16.xpose.msra.mxu0 0
            %750 = vmatprep.subr.bf16.mxu0 0
            %751 = vmatpush1.bf16.xpose.msra.mxu0 0
            %752 = vmatprep.subr.bf16.mxu0 0
            %753 = vmatpush1.bf16.xpose.msra.mxu0 0
            %754 = vmatprep.subr.bf16.mxu0 0
            %755 = vmatpush1.bf16.xpose.msra.mxu0 0
            %756 = vmatprep.subr.bf16.mxu0 0
            %757 = vmatpush1.bf16.xpose.msra.mxu0 0
            %758 = vmatprep.subr.bf16.mxu0 0
            %759 = vmatpush1.bf16.xpose.msra.mxu0 0
            %760 = vmatprep.subr.bf16.mxu0 0
            %761 = vmatpush1.bf16.xpose.msra.mxu0 %v746
            %762 = vmatprep.subr.bf16.mxu0 0
            %763 = vmatpush1.bf16.xpose.msra.mxu0 %v743
            %764 = vmatprep.subr.bf16.mxu0 0
            %765 = vmatpush2.bf16.xpose.msra.mxu0 0
            %766 = vmatprep.subr.bf16.mxu0 0
            %767 = vmatpush2.bf16.xpose.msra.mxu0 0
            %768 = vmatprep.subr.bf16.mxu0 0
            %769 = vmatpush2.bf16.xpose.msra.mxu0 0
            %770 = vmatprep.subr.bf16.mxu0 0
            %771 = vmatpush2.bf16.xpose.msra.mxu0 0
            %772 = vmatprep.subr.bf16.mxu0 0
            %773 = vmatpush2.bf16.xpose.msra.mxu0 0
            %774 = vmatprep.subr.bf16.mxu0 0
            %775 = vmatpush2.bf16.xpose.msra.mxu0 0
            %776 = vmatprep.subr.bf16.mxu0 0
            %777 = vmatpush2.bf16.xpose.msra.mxu0 0
            %778 = vmatprep.subr.bf16.mxu0 0
            %779 = vmatpush2.bf16.xpose.msra.mxu0 0
            %780 = vmatprep.mubr.bf16.mxu0 0
            %781 = vmatmul.mubr.bf16.gmra.mxu0 %v740
            %v782 = vpop.f32.mrf.mxu0
            %v783 = vadd.f32 0.0, %v782
            %v784 = vpop.f32.mrf.mxu0
            %v785 = vpop.f32.mrf.mxu0
            %v786 = vpop.f32.mrf.mxu0
            %787 = vdwg.mxu0
            %v788 = vld [vmem:[%s382] sm:$0xff]
            %v789 = vadd.f32 %v788, %v783
            %790 = vst.msk [vmem:[%s382] sm:$0xff] %vm709, %v789
          $region87: #{tpu_custom_call.1} parent=81 // loop_footer
            %s716 = sadd.s32 1, %s712
          $region88: #{tpu_custom_call.1} parent=81 // loop_footer_branch
            %711 = sbr.rel target = $region84
          $region89: #{tpu_custom_call.1} parent=81 // loop_exit
            _
        $region82: #{tpu_custom_call.1} parent=47 // pred_fallthru
          _
        %s791 = sand.u32 %s213, 1
        %s792 = scalar_lea.sflag [#allocation6], %s791
        %s793 = sand.u32 %s213, 1
        %s794 = smul.addr %s793, 8
        %s795 = scalar_lea.vmem [#allocation10], %s794
        // Predicated region
        $region90: #{tpu_custom_call.1} parent=47 // pred_check
          %p796 = pneg %p223
        $region91: #{tpu_custom_call.1} parent=47 // pred_check_branch
          %798 = sbr.rel (%p796) target = $region93
        $region92: #{tpu_custom_call.1} parent=47 // pred_region
          %s800 = ssub.s32 128, 128
          %801 = vsyncadd %s792, %s800
          %s802 = smul.addr %s31, 128
          %s803 = scalar_lea.hbm %s7, %s802
          %s805 = sshll.u32 %s795, 4
          %s806 = int_to_ptr.vmem [resolvable:$true] %s805
          %808 = dma.vmem_to_hbm [thread:$0]  %s806, 128, %s803, %s792
        $region93: #{tpu_custom_call.1} parent=47 // pred_fallthru
          _
      $region48: #{tpu_custom_call.1} parent=5 // pred_fallthru
        _
      %p809 = scmp.le.s32.totalorder 2, %s22
      // Predicated region
      $region94: #{tpu_custom_call.1} parent=5 // pred_check
        %p810 = pneg %p809
      $region95: #{tpu_custom_call.1} parent=5 // pred_check_branch
        %812 = sbr.rel (%p810) target = $region97
      $region96: #{tpu_custom_call.1} parent=5 // pred_region
        %s813 = ssub.s32 %s22, 2
        // Predicated region
        $region98: #{tpu_custom_call.1} parent=96 // pred_check
          %p814 = pneg %p229
        $region99: #{tpu_custom_call.1} parent=96 // pred_check_branch
          %816 = sbr.rel (%p814) target = $region101
        $region100: #{tpu_custom_call.1} parent=96 // pred_region
          %s817 = sand.u32 %s214, 1
          %s818 = scalar_lea.sflag [#allocation6], %s817
          %s819 = sand.u32 %s214, 1
          %s820 = smul.addr %s819, 8
          %s821 = scalar_lea.vmem [#allocation10], %s820
          %822 = dma.done %s818, 128
        $region101: #{tpu_custom_call.1} parent=96 // pred_fallthru
          _
      $region97: #{tpu_custom_call.1} parent=5 // pred_fallthru
        _
    $region6: #{tpu_custom_call.1} parent=1 // loop_footer
      %s26 = sadd.s32 1, %s22
    $region7: #{tpu_custom_call.1} parent=1 // loop_footer_branch
      %21 = sbr.rel target = $region3
    $region8: #{tpu_custom_call.1} parent=1 // loop_exit
      _
    %823 = vsyncpa [#allocation5], 1
    %s824 = scalar_lea.sflag [#allocation5], 1
    %825 = vsyncpa %s824, 1
    %826 = vsyncpa [#allocation8], 1
    %s827 = scalar_lea.sflag [#allocation8], 1
    %828 = vsyncpa %s827, 1
    %829 = vsyncpa [#allocation6], 1
    %s830 = scalar_lea.sflag [#allocation6], 1
    %831 = vsyncpa %s830, 1

</llo_original>
